<compile_context>
chip_gen: v6e
topology: v6e:2x2x1
jax: 0.10.0
libtpu: 0.0.40
codegen_flags: <defaults>
</compile_context>

<pallas_src>
import functools

import jax
import jax.numpy as jnp
from jax.experimental import pallas as pl
from jax.experimental.pallas import tpu as pltpu

LANES = 128  # every feature / im2col-K axis is zero-padded to the lane width


def _full_spec(shape):
    # Whole-array VMEM block (used by the tiny ungridded projector stage).
    return pl.BlockSpec(shape, lambda *_: (0,) * len(shape))


def _pad2(a, rows, cols):
    return jnp.pad(a, ((0, rows - a.shape[0]), (0, cols - a.shape[1])))


def _pad_row(a, cols):
    a = a.reshape(1, -1)
    return jnp.pad(a, ((0, 0), (0, cols - a.shape[1])))


def _pick_b_tile(batch):
    # Batch rows per grid step: a multiple of 8 sublanes when possible (full
    # unmasked output tiles), capped so one step's (b_tile*HW,128) activation
    # slab stays a few MB.  Falls back to the whole batch (grid of 1).
    for cand in (64, 32, 16, 8):
        if batch % cand == 0:
            return cand
    return batch


# ---------------------------------------------------------------------------
# Stage 1 (gridded over batch tiles, "parallel"):
#   conv3x3 (one im2col matmul) + bias + ReLU -> GAP -> Linear -> Linear
# ---------------------------------------------------------------------------
def _backbone_kernel(patches_ref,           # (b_tile*HW, 128) bf16 im2col patches
                     wconv_ref, bconv_ref,  # (128, 128) bf16, (1, 128) f32
                     w1_ref, b1_ref,        # children[-2] Linear
                     w2_ref, b2_ref,        # children[-1] Linear
                     hid_ref, repr_ref,     # (b_tile, 128) f32 outputs
                     *, b_tile, hw):
    f = wconv_ref.shape[1]

    # conv3x3 "same" as ONE lane-dense MXU matmul (K padded to 128), f32 acc.
    y = jnp.dot(patches_ref[...], wconv_ref[...],
                preferred_element_type=jnp.float32)            # (b_tile*hw, F)
    y = jnp.maximum(y + bconv_ref[...], 0.0)

    # global average pool: per-batch f32 sublane reduce (linear in B).
    feat = jnp.sum(y.reshape(b_tile, hw, f), axis=1) * (1.0 / hw)   # (b_tile, F)

    # children[-2]: Linear -> "hidden" (forward-hook output)
    hidden = jnp.dot(feat.astype(jnp.bfloat16), w1_ref[...],
                     preferred_element_type=jnp.float32) + b1_ref[...]
    hid_ref[...] = hidden

    # children[-1]: Linear -> "representation" (forward-hook output)
    repr_ref[...] = jnp.dot(hidden.astype(jnp.bfloat16), w2_ref[...],
                            preferred_element_type=jnp.float32) + b2_ref[...]


# ---------------------------------------------------------------------------
# Stage 2 (ungridded, full batch — BatchNorm1d needs full-batch statistics):
#   projector MLP: Linear -> BatchNorm1d(train) -> ReLU -> Linear
# ---------------------------------------------------------------------------
def _projector_kernel(rep_ref, pw1_ref, pb1_ref, gamma_ref, beta_ref,
                      pw2_ref, pb2_ref, proj_ref):
    h = jnp.dot(rep_ref[...].astype(jnp.bfloat16), pw1_ref[...],
                preferred_element_type=jnp.float32) + pb1_ref[...]
    mean = jnp.mean(h, axis=0, keepdims=True)                       # full batch
    var = jnp.mean(jnp.square(h - mean), axis=0, keepdims=True)     # biased var
    hn = (h - mean) * jax.lax.rsqrt(var + 1e-5)
    hn = jnp.maximum(hn * gamma_ref[...] + beta_ref[...], 0.0)
    proj_ref[...] = jnp.dot(hn.astype(jnp.bfloat16), pw2_ref[...],
                            preferred_element_type=jnp.float32) + pb2_ref[...]


# ---------------------------------------------------------------------------
# One-time parameter packing (hoisted out of the jitted forward).
# ---------------------------------------------------------------------------
def pack_params(params):
    cout, cin, kh, kw = params["conv_w"].shape
    f = LANES
    kp = LANES  # padded im2col K (9*Cin -> 128): native MXU shape on all gens

    # (cout,cin,kh,kw) -> (kh,kw,cin,cout) -> (9*cin, cout); patch column
    # ordering is k*Cin + cin with k = kh*3 + kw (matches wrapper im2col).
    wconv = jnp.transpose(params["conv_w"], (2, 3, 1, 0)).reshape(kh * kw * cin, cout)

    packed = dict(
        wconv=_pad2(wconv, kp, f).astype(jnp.bfloat16),
        bconv=_pad_row(params["conv_b"], f),
        w1=_pad2(params["lin1_w"], f, f).astype(jnp.bfloat16),
        b1=_pad_row(params["lin1_b"], f),
        w2=_pad2(params["lin2_w"], f, f).astype(jnp.bfloat16),
        b2=_pad_row(params["lin2_b"], f),
        pw1=_pad2(params["p_w1"], f, f).astype(jnp.bfloat16),
        pb1=_pad_row(params["p_b1"], f),
        gamma=_pad_row(params["p_gamma"], f),
        beta=_pad_row(params["p_beta"], f),
        pw2=_pad2(params["p_w2"], f, f).astype(jnp.bfloat16),
        pb2=_pad_row(params["p_b2"], f),
    )
    dims = dict(hid_dim=params["lin1_w"].shape[1],
                repr_dim=params["lin2_w"].shape[1],
                proj_size=params["p_w2"].shape[1])
    return packed, dims


# ---------------------------------------------------------------------------
# NetWrapper.forward(x, return_projection=True)
# ---------------------------------------------------------------------------
def net_wrapper_forward(packed, x, *, dims):
    B, Cin, H, W = x.shape
    F = LANES
    KP = LANES
    HW = H * W

    # ---- wrapper-side im2col: ONE lane-dense (B*HW, 128) bf16 patches slab ---
    xn = jnp.transpose(x, (0, 2, 3, 1))                      # NHWC
    xp = jnp.pad(xn, ((0, 0), (1, 1), (1, 1), (0, 0)))       # "same" padding
    taps = [xp[:, dy:dy + H, dx:dx + W, :] for dy in range(3) for dx in range(3)]
    patches = jnp.concatenate(taps, axis=-1).reshape(B * HW, 9 * Cin)
    patches = jnp.pad(patches, ((0, 0), (0, KP - 9 * Cin))).astype(jnp.bfloat16)

    b_tile = _pick_b_tile(B)
    n_tiles = B // b_tile
    backbone = functools.partial(_backbone_kernel, b_tile=b_tile, hw=HW)

    flops = 2 * B * HW * KP * F + 4 * B * HW * F + 4 * B * F * F
    bytes_accessed = (patches.size * 2 + (KP * F + 2 * F * F) * 2
                      + 3 * F * 4 + 2 * B * F * 4)

    hid_p, rep_p = pl.pallas_call(
        backbone,
        out_shape=(jax.ShapeDtypeStruct((B, F), jnp.float32),
                   jax.ShapeDtypeStruct((B, F), jnp.float32)),
        grid=(n_tiles,),
        in_specs=[
            pl.BlockSpec((b_tile * HW, KP), lambda i: (i, 0)),   # patches (tiled)
            pl.BlockSpec((KP, F), lambda i: (0, 0)),             # wconv
            pl.BlockSpec((1, F), lambda i: (0, 0)),              # bconv
            pl.BlockSpec((F, F), lambda i: (0, 0)),              # w1
            pl.BlockSpec((1, F), lambda i: (0, 0)),              # b1
            pl.BlockSpec((F, F), lambda i: (0, 0)),              # w2
            pl.BlockSpec((1, F), lambda i: (0, 0)),              # b2
        ],
        out_specs=(pl.BlockSpec((b_tile, F), lambda i: (i, 0)),
                   pl.BlockSpec((b_tile, F), lambda i: (i, 0))),
        compiler_params=pltpu.CompilerParams(
            dimension_semantics=("parallel",),
            vmem_limit_bytes=32 * 1024 * 1024),
        cost_estimate=pl.CostEstimate(flops=flops, transcendentals=0,
                                      bytes_accessed=bytes_accessed),
    )(patches, packed["wconv"], packed["bconv"],
      packed["w1"], packed["b1"], packed["w2"], packed["b2"])

    # Tiny full-batch BN + projector stage (only (B,128) crosses HBM).
    proj_p = pl.pallas_call(
        _projector_kernel,
        out_shape=jax.ShapeDtypeStruct((B, F), jnp.float32),
        in_specs=[_full_spec((B, F)),
                  _full_spec((F, F)), _full_spec((1, F)),
                  _full_spec((1, F)), _full_spec((1, F)),
                  _full_spec((F, F)), _full_spec((1, F))],
        out_specs=_full_spec((B, F)),
        compiler_params=pltpu.CompilerParams(
            vmem_limit_bytes=32 * 1024 * 1024),
    )(rep_p, packed["pw1"], packed["pb1"], packed["gamma"], packed["beta"],
      packed["pw2"], packed["pb2"])

    # un-pad back to the module's true feature sizes
    projection = proj_p[:, :dims["proj_size"]]
    hidden = hid_p[:, :dims["hid_dim"]]
    representation = rep_p[:, :dims["repr_dim"]]
    return projection, hidden, representation


if __name__ == "__main__":
    B, Cin, H, W = 2, 4, 16, 16
    Cout = 8                       # conv output channels
    hid_dim = 16                   # children[-2] output dim  (hidden)
    repr_dim = 16                  # children[-1] output dim  (representation)
    projection_size = 8
    projection_hidden_size = 32

    key = jax.random.PRNGKey(0)
    ks = jax.random.split(key, 12)

    def nrm(k, shape, scale=0.1):
        return scale * jax.random.normal(k, shape, dtype=jnp.float32)

    # Weights stored as (in, out) = torch weight.T; deterministic init.
    params = {
        "conv_w": nrm(ks[0], (Cout, Cin, 3, 3)),
        "conv_b": nrm(ks[1], (Cout,)),
        "lin1_w": nrm(ks[2], (Cout, hid_dim)),
        "lin1_b": nrm(ks[3], (hid_dim,)),
        "lin2_w": nrm(ks[4], (hid_dim, repr_dim)),
        "lin2_b": nrm(ks[5], (repr_dim,)),
        # projector MLP(dim=repr_dim, projection_size, projection_hidden_size)
        "p_w1": nrm(ks[6], (repr_dim, projection_hidden_size)),
        "p_b1": nrm(ks[7], (projection_hidden_size,)),
        "p_gamma": jnp.ones((projection_hidden_size,), jnp.float32),  # BN default
        "p_beta": jnp.zeros((projection_hidden_size,), jnp.float32),  # BN default
        "p_w2": nrm(ks[8], (projection_hidden_size, projection_size)),
        "p_b2": nrm(ks[9], (projection_size,)),
    }

    x = jax.random.normal(ks[10], (B, Cin, H, W), dtype=jnp.float32)

    # Pack parameters ONCE (outside the jitted forward) and reuse every step.
    packed, dims = pack_params(params)
    forward = jax.jit(functools.partial(net_wrapper_forward, dims=dims))

    projection, hidden, representation = forward(packed, x)
    jax.block_until_ready((projection, hidden, representation))

    assert projection.shape == (B, projection_size)
    assert hidden.shape == (B, hid_dim)
    assert representation.shape == (B, repr_dim)
    assert bool(jnp.all(jnp.isfinite(projection)))
    assert bool(jnp.all(jnp.isfinite(hidden)))
    assert bool(jnp.all(jnp.isfinite(representation)))
    print("KERNEL_OK")
</pallas_src>

<mosaic_0001>
module attributes {stable_mosaic.version = 11 : i64} {
  func.func @_backbone_kernel(%arg0: i32, %arg1: memref<512x128xbf16, #tpu.memory_space<vmem>>, %arg2: memref<128x128xbf16, #tpu.memory_space<vmem>>, %arg3: memref<1x128xf32, #tpu.memory_space<vmem>>, %arg4: memref<128x128xbf16, #tpu.memory_space<vmem>>, %arg5: memref<1x128xf32, #tpu.memory_space<vmem>>, %arg6: memref<128x128xbf16, #tpu.memory_space<vmem>>, %arg7: memref<1x128xf32, #tpu.memory_space<vmem>>, %arg8: memref<2x128xf32, #tpu.memory_space<vmem>>, %arg9: memref<2x128xf32, #tpu.memory_space<vmem>>) attributes {dimension_semantics = [#tpu.dimension_semantics<parallel>], iteration_bounds = array<i64: 1>, scalar_prefetch = 0 : i64, scratch_operands = 0 : i64, tpu.core_type = #tpu.core_type<tc>, window_params = [{transform_indices = @transform_0, window_bounds = array<i64: 512, 128>}, {pipeline_mode = #tpu.pipeline_mode<synchronous>, transform_indices = @transform_1, window_bounds = array<i64: 128, 128>}, {pipeline_mode = #tpu.pipeline_mode<synchronous>, transform_indices = @transform_2, window_bounds = array<i64: 1, 128>}, {pipeline_mode = #tpu.pipeline_mode<synchronous>, transform_indices = @transform_3, window_bounds = array<i64: 128, 128>}, {pipeline_mode = #tpu.pipeline_mode<synchronous>, transform_indices = @transform_4, window_bounds = array<i64: 1, 128>}, {pipeline_mode = #tpu.pipeline_mode<synchronous>, transform_indices = @transform_5, window_bounds = array<i64: 128, 128>}, {pipeline_mode = #tpu.pipeline_mode<synchronous>, transform_indices = @transform_6, window_bounds = array<i64: 1, 128>}, {transform_indices = @transform_7, window_bounds = array<i64: 2, 128>}, {transform_indices = @transform_8, window_bounds = array<i64: 2, 128>}]} {
    %c0 = arith.constant 0 : index
    %c0_0 = arith.constant 0 : index
    %0 = vector.load %arg1[%c0, %c0_0] : memref<512x128xbf16, #tpu.memory_space<vmem>>, vector<512x128xbf16>
    %c0_1 = arith.constant 0 : index
    %c0_2 = arith.constant 0 : index
    %1 = vector.load %arg2[%c0_1, %c0_2] : memref<128x128xbf16, #tpu.memory_space<vmem>>, vector<128x128xbf16>
    %cst = arith.constant dense<0.000000e+00> : vector<512x128xf32>
    %2 = tpu.matmul %0, %1, %cst {dimension_numbers = #tpu.dot_dimension_numbers<[1], [0], [0], [1], [0, 0, 1, 1], [], []>} : vector<512x128xbf16>, vector<128x128xbf16>, vector<512x128xf32> -> vector<512x128xf32>
    %c0_3 = arith.constant 0 : index
    %c0_4 = arith.constant 0 : index
    %3 = vector.load %arg3[%c0_3, %c0_4] : memref<1x128xf32, #tpu.memory_space<vmem>>, vector<1x128xf32>
    %4 = vector.broadcast %3 : vector<1x128xf32> to vector<512x128xf32>
    %5 = arith.addf %2, %4 : vector<512x128xf32>
    %cst_5 = arith.constant 0.000000e+00 : f32
    %6 = vector.broadcast %cst_5 : f32 to vector<512x128xf32>
    %7 = arith.maximumf %5, %6 : vector<512x128xf32>
    %8 = vector.shape_cast %7 : vector<512x128xf32> to vector<2x256x128xf32>
    %cst_6 = arith.constant dense<0.000000e+00> : vector<2x128xf32>
    %9 = vector.multi_reduction <add>, %8, %cst_6 [1] : vector<2x256x128xf32> to vector<2x128xf32>
    %cst_7 = arith.constant 3.906250e-03 : f32
    %10 = vector.broadcast %cst_7 : f32 to vector<2x128xf32>
    %11 = arith.mulf %9, %10 : vector<2x128xf32>
    %12 = arith.truncf %11 : vector<2x128xf32> to vector<2x128xbf16>
    %c0_8 = arith.constant 0 : index
    %c0_9 = arith.constant 0 : index
    %13 = vector.load %arg4[%c0_8, %c0_9] : memref<128x128xbf16, #tpu.memory_space<vmem>>, vector<128x128xbf16>
    %cst_10 = arith.constant dense<0.000000e+00> : vector<2x128xf32>
    %14 = tpu.matmul %12, %13, %cst_10 {dimension_numbers = #tpu.dot_dimension_numbers<[1], [0], [0], [1], [0, 0, 1, 1], [], []>} : vector<2x128xbf16>, vector<128x128xbf16>, vector<2x128xf32> -> vector<2x128xf32>
    %c0_11 = arith.constant 0 : index
    %c0_12 = arith.constant 0 : index
    %15 = vector.load %arg5[%c0_11, %c0_12] : memref<1x128xf32, #tpu.memory_space<vmem>>, vector<1x128xf32>
    %16 = vector.broadcast %15 : vector<1x128xf32> to vector<2x128xf32>
    %17 = arith.addf %14, %16 : vector<2x128xf32>
    %c0_13 = arith.constant 0 : index
    %c0_14 = arith.constant 0 : index
    %18 = vector.load %arg8[%c0_13, %c0_14] : memref<2x128xf32, #tpu.memory_space<vmem>>, vector<2x128xf32>
    tpu.vector_store %arg8[%c0_13, %c0_14], %17 {strides = array<i32>} : memref<2x128xf32, #tpu.memory_space<vmem>>, vector<2x128xf32>,
    %19 = arith.truncf %17 : vector<2x128xf32> to vector<2x128xbf16>
    %c0_15 = arith.constant 0 : index
    %c0_16 = arith.constant 0 : index
    %20 = vector.load %arg6[%c0_15, %c0_16] : memref<128x128xbf16, #tpu.memory_space<vmem>>, vector<128x128xbf16>
    %cst_17 = arith.constant dense<0.000000e+00> : vector<2x128xf32>
    %21 = tpu.matmul %19, %20, %cst_17 {dimension_numbers = #tpu.dot_dimension_numbers<[1], [0], [0], [1], [0, 0, 1, 1], [], []>} : vector<2x128xbf16>, vector<128x128xbf16>, vector<2x128xf32> -> vector<2x128xf32>
    %c0_18 = arith.constant 0 : index
    %c0_19 = arith.constant 0 : index
    %22 = vector.load %arg7[%c0_18, %c0_19] : memref<1x128xf32, #tpu.memory_space<vmem>>, vector<1x128xf32>
    %23 = vector.broadcast %22 : vector<1x128xf32> to vector<2x128xf32>
    %24 = arith.addf %21, %23 : vector<2x128xf32>
    %c0_20 = arith.constant 0 : index
    %c0_21 = arith.constant 0 : index
    %25 = vector.load %arg9[%c0_20, %c0_21] : memref<2x128xf32, #tpu.memory_space<vmem>>, vector<2x128xf32>
    tpu.vector_store %arg9[%c0_20, %c0_21], %24 {strides = array<i32>} : memref<2x128xf32, #tpu.memory_space<vmem>>, vector<2x128xf32>,
    return
  }
  func.func @transform_0(%arg0: i32) -> (i32, i32) {
    %c0_i32 = arith.constant 0 : i32
    %c0_i32_0 = arith.constant 0 : i32
    return %arg0, %c0_i32 : i32, i32
  }
  func.func @transform_1(%arg0: i32) -> (i32, i32) {
    %c0_i32 = arith.constant 0 : i32
    %c0_i32_0 = arith.constant 0 : i32
    %c0_i32_1 = arith.constant 0 : i32
    return %c0_i32, %c0_i32_0 : i32, i32
  }
  func.func @transform_2(%arg0: i32) -> (i32, i32) {
    %c0_i32 = arith.constant 0 : i32
    %c0_i32_0 = arith.constant 0 : i32
    %c0_i32_1 = arith.constant 0 : i32
    return %c0_i32, %c0_i32_0 : i32, i32
  }
  func.func @transform_3(%arg0: i32) -> (i32, i32) {
    %c0_i32 = arith.constant 0 : i32
    %c0_i32_0 = arith.constant 0 : i32
    %c0_i32_1 = arith.constant 0 : i32
    return %c0_i32, %c0_i32_0 : i32, i32
  }
  func.func @transform_4(%arg0: i32) -> (i32, i32) {
    %c0_i32 = arith.constant 0 : i32
    %c0_i32_0 = arith.constant 0 : i32
    %c0_i32_1 = arith.constant 0 : i32
    return %c0_i32, %c0_i32_0 : i32, i32
  }
  func.func @transform_5(%arg0: i32) -> (i32, i32) {
    %c0_i32 = arith.constant 0 : i32
    %c0_i32_0 = arith.constant 0 : i32
    %c0_i32_1 = arith.constant 0 : i32
    return %c0_i32, %c0_i32_0 : i32, i32
  }
  func.func @transform_6(%arg0: i32) -> (i32, i32) {
    %c0_i32 = arith.constant 0 : i32
    %c0_i32_0 = arith.constant 0 : i32
    %c0_i32_1 = arith.constant 0 : i32
    return %c0_i32, %c0_i32_0 : i32, i32
  }
  func.func @transform_7(%arg0: i32) -> (i32, i32) {
    %c0_i32 = arith.constant 0 : i32
    %c0_i32_0 = arith.constant 0 : i32
    return %arg0, %c0_i32 : i32, i32
  }
  func.func @transform_8(%arg0: i32) -> (i32, i32) {
    %c0_i32 = arith.constant 0 : i32
    %c0_i32_0 = arith.constant 0 : i32
    return %arg0, %c0_i32 : i32, i32
  }
}

module attributes {stable_mosaic.version = 11 : i64} {
  func.func @_projector_kernel(%arg0: memref<2x128xf32, #tpu.memory_space<vmem>>, %arg1: memref<128x128xbf16, #tpu.memory_space<vmem>>, %arg2: memref<1x128xf32, #tpu.memory_space<vmem>>, %arg3: memref<1x128xf32, #tpu.memory_space<vmem>>, %arg4: memref<1x128xf32, #tpu.memory_space<vmem>>, %arg5: memref<128x128xbf16, #tpu.memory_space<vmem>>, %arg6: memref<1x128xf32, #tpu.memory_space<vmem>>, %arg7: memref<2x128xf32, #tpu.memory_space<vmem>>) attributes {dimension_semantics = [], scalar_prefetch = 0 : i64, scratch_operands = 0 : i64, tpu.core_type = #tpu.core_type<tc>} {
    %c0 = arith.constant 0 : index
    %c0_0 = arith.constant 0 : index
    %0 = vector.load %arg0[%c0, %c0_0] : memref<2x128xf32, #tpu.memory_space<vmem>>, vector<2x128xf32>
    %1 = arith.truncf %0 : vector<2x128xf32> to vector<2x128xbf16>
    %c0_1 = arith.constant 0 : index
    %c0_2 = arith.constant 0 : index
    %2 = vector.load %arg1[%c0_1, %c0_2] : memref<128x128xbf16, #tpu.memory_space<vmem>>, vector<128x128xbf16>
    %cst = arith.constant dense<0.000000e+00> : vector<2x128xf32>
    %3 = tpu.matmul %1, %2, %cst {dimension_numbers = #tpu.dot_dimension_numbers<[1], [0], [0], [1], [0, 0, 1, 1], [], []>} : vector<2x128xbf16>, vector<128x128xbf16>, vector<2x128xf32> -> vector<2x128xf32>
    %c0_3 = arith.constant 0 : index
    %c0_4 = arith.constant 0 : index
    %4 = vector.load %arg2[%c0_3, %c0_4] : memref<1x128xf32, #tpu.memory_space<vmem>>, vector<1x128xf32>
    %5 = vector.broadcast %4 : vector<1x128xf32> to vector<2x128xf32>
    %6 = arith.addf %3, %5 : vector<2x128xf32>
    %cst_5 = arith.constant dense<0.000000e+00> : vector<128xf32>
    %7 = vector.multi_reduction <add>, %6, %cst_5 [0] : vector<2x128xf32> to vector<128xf32>
    %8 = vector.shape_cast %7 : vector<128xf32> to vector<1x128xf32>
    %cst_6 = arith.constant 2.000000e+00 : f32
    %9 = vector.broadcast %cst_6 : f32 to vector<1x128xf32>
    %10 = arith.divf %8, %9 : vector<1x128xf32>
    %11 = vector.broadcast %10 : vector<1x128xf32> to vector<2x128xf32>
    %12 = arith.subf %6, %11 : vector<2x128xf32>
    %13 = arith.mulf %12, %12 : vector<2x128xf32>
    %cst_7 = arith.constant dense<0.000000e+00> : vector<128xf32>
    %14 = vector.multi_reduction <add>, %13, %cst_7 [0] : vector<2x128xf32> to vector<128xf32>
    %15 = vector.shape_cast %14 : vector<128xf32> to vector<1x128xf32>
    %cst_8 = arith.constant 2.000000e+00 : f32
    %16 = vector.broadcast %cst_8 : f32 to vector<1x128xf32>
    %17 = arith.divf %15, %16 : vector<1x128xf32>
    %18 = vector.broadcast %10 : vector<1x128xf32> to vector<2x128xf32>
    %19 = arith.subf %6, %18 : vector<2x128xf32>
    %cst_9 = arith.constant 9.99999974E-6 : f32
    %20 = vector.broadcast %cst_9 : f32 to vector<1x128xf32>
    %21 = arith.addf %17, %20 : vector<1x128xf32>
    %22 = math.rsqrt %21 : vector<1x128xf32>
    %23 = vector.broadcast %22 : vector<1x128xf32> to vector<2x128xf32>
    %24 = arith.mulf %19, %23 : vector<2x128xf32>
    %c0_10 = arith.constant 0 : index
    %c0_11 = arith.constant 0 : index
    %25 = vector.load %arg3[%c0_10, %c0_11] : memref<1x128xf32, #tpu.memory_space<vmem>>, vector<1x128xf32>
    %26 = vector.broadcast %25 : vector<1x128xf32> to vector<2x128xf32>
    %27 = arith.mulf %24, %26 : vector<2x128xf32>
    %c0_12 = arith.constant 0 : index
    %c0_13 = arith.constant 0 : index
    %28 = vector.load %arg4[%c0_12, %c0_13] : memref<1x128xf32, #tpu.memory_space<vmem>>, vector<1x128xf32>
    %29 = vector.broadcast %28 : vector<1x128xf32> to vector<2x128xf32>
    %30 = arith.addf %27, %29 : vector<2x128xf32>
    %cst_14 = arith.constant 0.000000e+00 : f32
    %31 = vector.broadcast %cst_14 : f32 to vector<2x128xf32>
    %32 = arith.maximumf %30, %31 : vector<2x128xf32>
    %33 = arith.truncf %32 : vector<2x128xf32> to vector<2x128xbf16>
    %c0_15 = arith.constant 0 : index
    %c0_16 = arith.constant 0 : index
    %34 = vector.load %arg5[%c0_15, %c0_16] : memref<128x128xbf16, #tpu.memory_space<vmem>>, vector<128x128xbf16>
    %cst_17 = arith.constant dense<0.000000e+00> : vector<2x128xf32>
    %35 = tpu.matmul %33, %34, %cst_17 {dimension_numbers = #tpu.dot_dimension_numbers<[1], [0], [0], [1], [0, 0, 1, 1], [], []>} : vector<2x128xbf16>, vector<128x128xbf16>, vector<2x128xf32> -> vector<2x128xf32>
    %c0_18 = arith.constant 0 : index
    %c0_19 = arith.constant 0 : index
    %36 = vector.load %arg6[%c0_18, %c0_19] : memref<1x128xf32, #tpu.memory_space<vmem>>, vector<1x128xf32>
    %37 = vector.broadcast %36 : vector<1x128xf32> to vector<2x128xf32>
    %38 = arith.addf %35, %37 : vector<2x128xf32>
    %c0_20 = arith.constant 0 : index
    %c0_21 = arith.constant 0 : index
    %39 = vector.load %arg7[%c0_20, %c0_21] : memref<2x128xf32, #tpu.memory_space<vmem>>, vector<2x128xf32>
    tpu.vector_store %arg7[%c0_20, %c0_21], %38 {strides = array<i32>} : memref<2x128xf32, #tpu.memory_space<vmem>>, vector<2x128xf32>,
    return
  }
}

</mosaic_0001>

<llo_original>
// kernel: net_wrapper_forward.3
$region0: #{net_wrapper_forward.3}
  #allocation0 [shape = 'u32[]', space=smem, size = 0x4, offset = 0x4, fixed_abs, tag = 'smem constant byte address 0x4 - core index']
  #allocation1 [shape = 'u32[144,128]{1,0:T(1,128)}', space=vmem, size = 0x12000, scoped, tag = 'internal scratch']
  %s0 = inlined_call_operand.vmem [shape: f32[2,128], index: 0, kind: input, shape index: {}]
  %s1 = inlined_call_operand.vmem [shape: bf16[128,128], index: 1, kind: input, shape index: {}]
  %s2 = inlined_call_operand.vmem [shape: f32[1,128], index: 2, kind: input, shape index: {}]
  %s3 = inlined_call_operand.vmem [shape: f32[1,128], index: 3, kind: input, shape index: {}]
  %s4 = inlined_call_operand.vmem [shape: f32[1,128], index: 4, kind: input, shape index: {}]
  %s5 = inlined_call_operand.vmem [shape: bf16[128,128], index: 5, kind: input, shape index: {}]
  %s6 = inlined_call_operand.vmem [shape: f32[1,128], index: 6, kind: input, shape index: {}]
  %s7 = inlined_call_operand.hbm [shape: f32[2,128], index: 7, kind: output, shape index: {}]
  %s8 = sld [smem:[#allocation0]]
  $region38: #{net_wrapper_forward.3} parent=0
    _
  %s10 = ssub.s32 1, %s8
  %s11 = scalar_select 0, %s10, %s8
  $region1: #{net_wrapper_forward.3} parent=0
    #allocation2 [shape = 'u8[1024]{0}', space=vmem, size = 0x400, scoped, tag = 'output window, operand 0, single buffered']
    #allocation3 [shape = 's32[1]{0}', space=sflag, size = 0x4, scoped, tag = 'scoped memory for net_wrapper_forward.3']
    %12 = vsyncpa [#allocation3], 0
    // Predicated region
    $region2: #{net_wrapper_forward.3} parent=1 // pred_check
      _
    $region3: #{net_wrapper_forward.3} parent=1 // pred_check_branch
      %14 = sbr.rel (0) target = $region5
    $region4: #{net_wrapper_forward.3} parent=1 // pred_region
      _
    $region5: #{net_wrapper_forward.3} parent=1 // pred_fallthru
      _
    // Predicated region
    $region6: #{net_wrapper_forward.3} parent=1 // pred_check
      _
    $region7: #{net_wrapper_forward.3} parent=1 // pred_check_branch
      %16 = sbr.rel (0) target = $region9
    $region8: #{net_wrapper_forward.3} parent=1 // pred_region
      _
    $region9: #{net_wrapper_forward.3} parent=1 // pred_fallthru
      _
    // Predicated region
    $region10: #{net_wrapper_forward.3} parent=1 // pred_check
      _
    $region11: #{net_wrapper_forward.3} parent=1 // pred_check_branch
      %18 = sbr.rel (0) target = $region13
    $region12: #{net_wrapper_forward.3} parent=1 // pred_region
      _
    $region13: #{net_wrapper_forward.3} parent=1 // pred_fallthru
      _
    // Predicated region
    $region14: #{net_wrapper_forward.3} parent=1 // pred_check
      _
    $region15: #{net_wrapper_forward.3} parent=1 // pred_check_branch
      %20 = sbr.rel (0) target = $region17
    $region16: #{net_wrapper_forward.3} parent=1 // pred_region
      _
    $region17: #{net_wrapper_forward.3} parent=1 // pred_fallthru
      _
    // Predicated region
    $region18: #{net_wrapper_forward.3} parent=1 // pred_check
      _
    $region19: #{net_wrapper_forward.3} parent=1 // pred_check_branch
      %22 = sbr.rel (0) target = $region21
    $region20: #{net_wrapper_forward.3} parent=1 // pred_region
      _
    $region21: #{net_wrapper_forward.3} parent=1 // pred_fallthru
      _
    // Predicated region
    $region22: #{net_wrapper_forward.3} parent=1 // pred_check
      _
    $region23: #{net_wrapper_forward.3} parent=1 // pred_check_branch
      %24 = sbr.rel (0) target = $region25
    $region24: #{net_wrapper_forward.3} parent=1 // pred_region
      _
    $region25: #{net_wrapper_forward.3} parent=1 // pred_fallthru
      _
    // Predicated region
    $region26: #{net_wrapper_forward.3} parent=1 // pred_check
      _
    $region27: #{net_wrapper_forward.3} parent=1 // pred_check_branch
      %26 = sbr.rel (0) target = $region29
    $region28: #{net_wrapper_forward.3} parent=1 // pred_region
      _
    $region29: #{net_wrapper_forward.3} parent=1 // pred_fallthru
      _
    %v28 = vld [vmem:[%s0] sm:$0x3]
    %v29 = vpack.c.bf16 %v28, %v28
    %v30 = vld [vmem:[%s1] sm:$0xf]
    %v31 = vld [vmem:[%s1 + $0x4] sm:$0xf]
    %v32 = vld [vmem:[%s1 + $0x8] sm:$0xf]
    %v33 = vld [vmem:[%s1 + $0xc] sm:$0xf]
    %v34 = vld [vmem:[%s1 + $0x10] sm:$0xf]
    %v35 = vld [vmem:[%s1 + $0x14] sm:$0xf]
    %v36 = vld [vmem:[%s1 + $0x18] sm:$0xf]
    %v37 = vld [vmem:[%s1 + $0x1c] sm:$0xf]
    %v38 = vld [vmem:[%s1 + $0x20] sm:$0xf]
    %v39 = vld [vmem:[%s1 + $0x24] sm:$0xf]
    %v40 = vld [vmem:[%s1 + $0x28] sm:$0xf]
    %v41 = vld [vmem:[%s1 + $0x2c] sm:$0xf]
    %v42 = vld [vmem:[%s1 + $0x30] sm:$0xf]
    %v43 = vld [vmem:[%s1 + $0x34] sm:$0xf]
    %v44 = vld [vmem:[%s1 + $0x38] sm:$0xf]
    %v45 = vld [vmem:[%s1 + $0x3c] sm:$0xf]
    %v46 = vld [vmem:[%s2] sm:$0x1]
    %v48 = vlaneseq
    %v49 = vshrl.u32 %v48, 7
    %v50 = vsub.s32 0, %v49
    %v51 = vrot.slane %v46, %v50
    %v69 = vunpack.c.l.b16 %v30
    %v70 = vunpack.c.l.b16 %v31
    %v71 = vunpack.c.l.b16 %v32
    %v72 = vunpack.c.l.b16 %v33
    %v73 = vunpack.c.l.b16 %v34
    %v74 = vunpack.c.l.b16 %v35
    %v75 = vunpack.c.l.b16 %v36
    %v76 = vunpack.c.l.b16 %v37
    %v77 = vunpack.c.l.b16 %v38
    %v78 = vunpack.c.l.b16 %v39
    %v79 = vunpack.c.l.b16 %v40
    %v80 = vunpack.c.l.b16 %v41
    %v81 = vunpack.c.l.b16 %v42
    %v82 = vunpack.c.l.b16 %v43
    %v83 = vunpack.c.l.b16 %v44
    %v84 = vunpack.c.l.b16 %v45
    %v85 = vpack.c.b16 %v70, %v69
    %v86 = vpack.c.b16 %v72, %v71
    %v87 = vpack.c.b16 %v74, %v73
    %v88 = vpack.c.b16 %v76, %v75
    %v89 = vpack.c.b16 %v78, %v77
    %v90 = vpack.c.b16 %v80, %v79
    %v91 = vpack.c.b16 %v82, %v81
    %v92 = vpack.c.b16 %v84, %v83
    %101 = vmatprep.subr.bf16.mxu0 0
    %102 = vmatpush1.bf16.msra.mxu0 %v92
    %103 = vmatprep.subr.bf16.mxu0 0
    %104 = vmatpush1.bf16.msra.mxu0 %v91
    %105 = vmatprep.subr.bf16.mxu0 0
    %106 = vmatpush1.bf16.msra.mxu0 %v90
    %107 = vmatprep.subr.bf16.mxu0 0
    %108 = vmatpush1.bf16.msra.mxu0 %v89
    %109 = vmatprep.subr.bf16.mxu0 0
    %110 = vmatpush1.bf16.msra.mxu0 %v88
    %111 = vmatprep.subr.bf16.mxu0 0
    %112 = vmatpush1.bf16.msra.mxu0 %v87
    %113 = vmatprep.subr.bf16.mxu0 0
    %114 = vmatpush1.bf16.msra.mxu0 %v86
    %115 = vmatprep.subr.bf16.mxu0 0
    %116 = vmatpush1.bf16.msra.mxu0 %v85
    %117 = vmatprep.subr.bf16.mxu0 0
    %118 = vmatpush2.bf16.msra.mxu0 0
    %119 = vmatprep.subr.bf16.mxu0 0
    %120 = vmatpush2.bf16.msra.mxu0 0
    %121 = vmatprep.subr.bf16.mxu0 0
    %122 = vmatpush2.bf16.msra.mxu0 0
    %123 = vmatprep.subr.bf16.mxu0 0
    %124 = vmatpush2.bf16.msra.mxu0 0
    %125 = vmatprep.subr.bf16.mxu0 0
    %126 = vmatpush2.bf16.msra.mxu0 0
    %127 = vmatprep.subr.bf16.mxu0 0
    %128 = vmatpush2.bf16.msra.mxu0 0
    %129 = vmatprep.subr.bf16.mxu0 0
    %130 = vmatpush2.bf16.msra.mxu0 0
    %131 = vmatprep.subr.bf16.mxu0 0
    %132 = vmatpush2.bf16.msra.mxu0 0
    %133 = vmatprep.mubr.bf16.mxu0 0
    %134 = vmatmul.mubr.bf16.gmra.mxu0 %v29
    %v135 = vpop.f32.mrf.mxu0
    %v136 = vadd.f32 %v51, %v135
    %v137 = vpop.f32.mrf.mxu0
    %v138 = vpop.f32.mrf.mxu0
    %v139 = vpop.f32.mrf.mxu0
    %140 = vdwg.mxu0
    %vm141 = vcmask 1041408
    %v142 = vsel %vm141, %v136, 0.0
    %v143 = vrot.slane %v142, 4
    %v144 = vadd.f32 %v142, %v143
    %v145 = vrot.slane %v144, 2
    %v146 = vadd.f32 %v144, %v145
    %v147 = vrot.slane %v146, 1
    %v148 = vadd.f32 %v146, %v147
    %v149 = vrcp.pop 2.0
    %v150 = vmul.f32 %v148, %v149
    %v151 = vsub.f32 %v136, %v150
    %v152 = vmul.f32 %v151, %v151
    %v153 = vsel %vm141, %v152, 0.0
    %v154 = vrot.slane %v153, 4
    %v155 = vadd.f32 %v153, %v154
    %v156 = vrot.slane %v155, 2
    %v157 = vadd.f32 %v155, %v156
    %v158 = vrot.slane %v157, 1
    %v159 = vadd.f32 %v157, %v158
    %v160 = vmul.f32 %v159, %v149
    %v161 = vadd.f32 %v160, 1e-05
    %v162 = vrsqrt.pop %v161
    %v163 = vmul.f32 %v151, %v162
    %v164 = vld [vmem:[%s3] sm:$0x1]
    %v166 = vlaneseq
    %v167 = vshrl.u32 %v166, 7
    %v168 = vsub.s32 0, %v167
    %v169 = vrot.slane %v164, %v168
    %v171 = vmul.f32 %v163, %v169
    %v172 = vld [vmem:[%s4] sm:$0x1]
    %v174 = vlaneseq
    %v175 = vshrl.u32 %v174, 7
    %v176 = vsub.s32 0, %v175
    %v177 = vrot.slane %v172, %v176
    %v179 = vadd.f32 %v171, %v177
    %v180 = vmax.f32 %v179, 0.0
    %v181 = vpack.c.bf16 %v180, %v180
    %v182 = vld [vmem:[%s5] sm:$0xf]
    %v183 = vld [vmem:[%s5 + $0x4] sm:$0xf]
    %v184 = vld [vmem:[%s5 + $0x8] sm:$0xf]
    %v185 = vld [vmem:[%s5 + $0xc] sm:$0xf]
    %v186 = vld [vmem:[%s5 + $0x10] sm:$0xf]
    %v187 = vld [vmem:[%s5 + $0x14] sm:$0xf]
    %v188 = vld [vmem:[%s5 + $0x18] sm:$0xf]
    %v189 = vld [vmem:[%s5 + $0x1c] sm:$0xf]
    %v190 = vld [vmem:[%s5 + $0x20] sm:$0xf]
    %v191 = vld [vmem:[%s5 + $0x24] sm:$0xf]
    %v192 = vld [vmem:[%s5 + $0x28] sm:$0xf]
    %v193 = vld [vmem:[%s5 + $0x2c] sm:$0xf]
    %v194 = vld [vmem:[%s5 + $0x30] sm:$0xf]
    %v195 = vld [vmem:[%s5 + $0x34] sm:$0xf]
    %v196 = vld [vmem:[%s5 + $0x38] sm:$0xf]
    %v197 = vld [vmem:[%s5 + $0x3c] sm:$0xf]
    %v198 = vld [vmem:[%s6] sm:$0x1]
    %v200 = vlaneseq
    %v201 = vshrl.u32 %v200, 7
    %v202 = vsub.s32 0, %v201
    %v203 = vrot.slane %v198, %v202
    %v221 = vunpack.c.l.b16 %v182
    %v222 = vunpack.c.l.b16 %v183
    %v223 = vunpack.c.l.b16 %v184
    %v224 = vunpack.c.l.b16 %v185
    %v225 = vunpack.c.l.b16 %v186
    %v226 = vunpack.c.l.b16 %v187
    %v227 = vunpack.c.l.b16 %v188
    %v228 = vunpack.c.l.b16 %v189
    %v229 = vunpack.c.l.b16 %v190
    %v230 = vunpack.c.l.b16 %v191
    %v231 = vunpack.c.l.b16 %v192
    %v232 = vunpack.c.l.b16 %v193
    %v233 = vunpack.c.l.b16 %v194
    %v234 = vunpack.c.l.b16 %v195
    %v235 = vunpack.c.l.b16 %v196
    %v236 = vunpack.c.l.b16 %v197
    %v237 = vpack.c.b16 %v222, %v221
    %v238 = vpack.c.b16 %v224, %v223
    %v239 = vpack.c.b16 %v226, %v225
    %v240 = vpack.c.b16 %v228, %v227
    %v241 = vpack.c.b16 %v230, %v229
    %v242 = vpack.c.b16 %v232, %v231
    %v243 = vpack.c.b16 %v234, %v233
    %v244 = vpack.c.b16 %v236, %v235
    %253 = vmatprep.subr.bf16.mxu0 0
    %254 = vmatpush1.bf16.msra.mxu0 %v244
    %255 = vmatprep.subr.bf16.mxu0 0
    %256 = vmatpush1.bf16.msra.mxu0 %v243
    %257 = vmatprep.subr.bf16.mxu0 0
    %258 = vmatpush1.bf16.msra.mxu0 %v242
    %259 = vmatprep.subr.bf16.mxu0 0
    %260 = vmatpush1.bf16.msra.mxu0 %v241
    %261 = vmatprep.subr.bf16.mxu0 0
    %262 = vmatpush1.bf16.msra.mxu0 %v240
    %263 = vmatprep.subr.bf16.mxu0 0
    %264 = vmatpush1.bf16.msra.mxu0 %v239
    %265 = vmatprep.subr.bf16.mxu0 0
    %266 = vmatpush1.bf16.msra.mxu0 %v238
    %267 = vmatprep.subr.bf16.mxu0 0
    %268 = vmatpush1.bf16.msra.mxu0 %v237
    %269 = vmatprep.subr.bf16.mxu0 0
    %270 = vmatpush2.bf16.msra.mxu0 0
    %271 = vmatprep.subr.bf16.mxu0 0
    %272 = vmatpush2.bf16.msra.mxu0 0
    %273 = vmatprep.subr.bf16.mxu0 0
    %274 = vmatpush2.bf16.msra.mxu0 0
    %275 = vmatprep.subr.bf16.mxu0 0
    %276 = vmatpush2.bf16.msra.mxu0 0
    %277 = vmatprep.subr.bf16.mxu0 0
    %278 = vmatpush2.bf16.msra.mxu0 0
    %279 = vmatprep.subr.bf16.mxu0 0
    %280 = vmatpush2.bf16.msra.mxu0 0
    %281 = vmatprep.subr.bf16.mxu0 0
    %282 = vmatpush2.bf16.msra.mxu0 0
    %283 = vmatprep.subr.bf16.mxu0 0
    %284 = vmatpush2.bf16.msra.mxu0 0
    %285 = vmatprep.mubr.bf16.mxu0 0
    %286 = vmatmul.mubr.bf16.gmra.mxu0 %v181
    %v287 = vpop.f32.mrf.mxu0
    %v288 = vadd.f32 %v203, %v287
    %v289 = vpop.f32.mrf.mxu0
    %v290 = vpop.f32.mrf.mxu0
    %v291 = vpop.f32.mrf.mxu0
    %292 = vdwg.mxu0
    %293 = vst [vmem:[#allocation2] sm:$0x3] %v288
    // Predicated region
    $region30: #{net_wrapper_forward.3} parent=1 // pred_check
      _
    $region31: #{net_wrapper_forward.3} parent=1 // pred_check_branch
      %295 = sbr.rel (0) target = $region33
    $region32: #{net_wrapper_forward.3} parent=1 // pred_region
      %s297 = ssub.s32 32, 32
      %298 = vsyncadd [#allocation3], %s297
      %s300 = sshll.u32 [#allocation2], 4
      %s301 = int_to_ptr.vmem [resolvable:$true] %s300
      %303 = dma.vmem_to_hbm [thread:$0]  %s301, 32, %s7, [#allocation3]
    $region33: #{net_wrapper_forward.3} parent=1 // pred_fallthru
      _
    // Predicated region
    $region34: #{net_wrapper_forward.3} parent=1 // pred_check
      _
    $region35: #{net_wrapper_forward.3} parent=1 // pred_check_branch
      %305 = sbr.rel (0) target = $region37
    $region36: #{net_wrapper_forward.3} parent=1 // pred_region
      %306 = dma.done [#allocation3], 32
    $region37: #{net_wrapper_forward.3} parent=1 // pred_fallthru
      _
    %307 = vsyncpa [#allocation3], 1

// kernel: net_wrapper_forward.2
$region0: #{net_wrapper_forward.2}
  #allocation0 [shape = 'u32[]', space=smem, size = 0x4, offset = 0x4, fixed_abs, tag = 'smem constant byte address 0x4 - core index']
  #allocation1 [shape = 'u32[144,128]{1,0:T(1,128)}', space=vmem, size = 0x12000, scoped, tag = 'internal scratch']
  %s0 = inlined_call_operand.vmem [shape: bf16[512,128], index: 0, kind: input, shape index: {}]
  %s1 = inlined_call_operand.vmem [shape: bf16[128,128], index: 1, kind: input, shape index: {}]
  %s2 = inlined_call_operand.vmem [shape: f32[1,128], index: 2, kind: input, shape index: {}]
  %s3 = inlined_call_operand.vmem [shape: bf16[128,128], index: 3, kind: input, shape index: {}]
  %s4 = inlined_call_operand.vmem [shape: f32[1,128], index: 4, kind: input, shape index: {}]
  %s5 = inlined_call_operand.vmem [shape: bf16[128,128], index: 5, kind: input, shape index: {}]
  %s6 = inlined_call_operand.vmem [shape: f32[1,128], index: 6, kind: input, shape index: {}]
  %s7 = inlined_call_operand.hbm [shape: f32[2,128], index: 7, kind: output, shape index: {0}]
  %s8 = inlined_call_operand.vmem [shape: f32[2,128], index: 8, kind: output, shape index: {1}]
  %9 = xla_tuple %s7, %s8
  %s10 = sld [smem:[#allocation0]]
  $region46: #{net_wrapper_forward.2} parent=0
    _
  %s12 = ssub.s32 1, %s10
  %s13 = scalar_select 0, %s12, %s10
  $region1: #{net_wrapper_forward.2} parent=0
    #allocation2 [shape = 'u8[1024]{0}', space=vmem, size = 0x400, scoped, tag = 'output window, operand 0, single buffered']
    #allocation3 [shape = 's32[1]{0}', space=sflag, size = 0x4, scoped, tag = 'scoped memory for net_wrapper_forward.2']
    %14 = vsyncpa [#allocation3], 0
    // Predicated region
    $region2: #{net_wrapper_forward.2} parent=1 // pred_check
      _
    $region3: #{net_wrapper_forward.2} parent=1 // pred_check_branch
      %16 = sbr.rel (0) target = $region5
    $region4: #{net_wrapper_forward.2} parent=1 // pred_region
      _
    $region5: #{net_wrapper_forward.2} parent=1 // pred_fallthru
      _
    // Predicated region
    $region6: #{net_wrapper_forward.2} parent=1 // pred_check
      _
    $region7: #{net_wrapper_forward.2} parent=1 // pred_check_branch
      %18 = sbr.rel (0) target = $region9
    $region8: #{net_wrapper_forward.2} parent=1 // pred_region
      _
    $region9: #{net_wrapper_forward.2} parent=1 // pred_fallthru
      _
    // Predicated region
    $region10: #{net_wrapper_forward.2} parent=1 // pred_check
      _
    $region11: #{net_wrapper_forward.2} parent=1 // pred_check_branch
      %20 = sbr.rel (0) target = $region13
    $region12: #{net_wrapper_forward.2} parent=1 // pred_region
      _
    $region13: #{net_wrapper_forward.2} parent=1 // pred_fallthru
      _
    // Predicated region
    $region14: #{net_wrapper_forward.2} parent=1 // pred_check
      _
    $region15: #{net_wrapper_forward.2} parent=1 // pred_check_branch
      %22 = sbr.rel (0) target = $region17
    $region16: #{net_wrapper_forward.2} parent=1 // pred_region
      _
    $region17: #{net_wrapper_forward.2} parent=1 // pred_fallthru
      _
    // Predicated region
    $region18: #{net_wrapper_forward.2} parent=1 // pred_check
      _
    $region19: #{net_wrapper_forward.2} parent=1 // pred_check_branch
      %24 = sbr.rel (0) target = $region21
    $region20: #{net_wrapper_forward.2} parent=1 // pred_region
      _
    $region21: #{net_wrapper_forward.2} parent=1 // pred_fallthru
      _
    // Predicated region
    $region22: #{net_wrapper_forward.2} parent=1 // pred_check
      _
    $region23: #{net_wrapper_forward.2} parent=1 // pred_check_branch
      %26 = sbr.rel (0) target = $region25
    $region24: #{net_wrapper_forward.2} parent=1 // pred_region
      _
    $region25: #{net_wrapper_forward.2} parent=1 // pred_fallthru
      _
    // Predicated region
    $region26: #{net_wrapper_forward.2} parent=1 // pred_check
      _
    $region27: #{net_wrapper_forward.2} parent=1 // pred_check_branch
      %28 = sbr.rel (0) target = $region29
    $region28: #{net_wrapper_forward.2} parent=1 // pred_region
      _
    $region29: #{net_wrapper_forward.2} parent=1 // pred_fallthru
      _
    %v30 = vld [vmem:[%s0] sm:$0xf]
    %v31 = vld [vmem:[%s0 + $0x4] sm:$0xf]
    %v32 = vld [vmem:[%s0 + $0x8] sm:$0xf]
    %v33 = vld [vmem:[%s0 + $0xc] sm:$0xf]
    %v34 = vld [vmem:[%s0 + $0x10] sm:$0xf]
    %v35 = vld [vmem:[%s0 + $0x14] sm:$0xf]
    %v36 = vld [vmem:[%s0 + $0x18] sm:$0xf]
    %v37 = vld [vmem:[%s0 + $0x1c] sm:$0xf]
    %v38 = vld [vmem:[%s0 + $0x20] sm:$0xf]
    %v39 = vld [vmem:[%s0 + $0x24] sm:$0xf]
    %v40 = vld [vmem:[%s0 + $0x28] sm:$0xf]
    %v41 = vld [vmem:[%s0 + $0x2c] sm:$0xf]
    %v42 = vld [vmem:[%s0 + $0x30] sm:$0xf]
    %v43 = vld [vmem:[%s0 + $0x34] sm:$0xf]
    %v44 = vld [vmem:[%s0 + $0x38] sm:$0xf]
    %v45 = vld [vmem:[%s0 + $0x3c] sm:$0xf]
    %v46 = vld [vmem:[%s0 + $0x40] sm:$0xf]
    %v47 = vld [vmem:[%s0 + $0x44] sm:$0xf]
    %v48 = vld [vmem:[%s0 + $0x48] sm:$0xf]
    %v49 = vld [vmem:[%s0 + $0x4c] sm:$0xf]
    %v50 = vld [vmem:[%s0 + $0x50] sm:$0xf]
    %v51 = vld [vmem:[%s0 + $0x54] sm:$0xf]
    %v52 = vld [vmem:[%s0 + $0x58] sm:$0xf]
    %v53 = vld [vmem:[%s0 + $0x5c] sm:$0xf]
    %v54 = vld [vmem:[%s0 + $0x60] sm:$0xf]
    %v55 = vld [vmem:[%s0 + $0x64] sm:$0xf]
    %v56 = vld [vmem:[%s0 + $0x68] sm:$0xf]
    %v57 = vld [vmem:[%s0 + $0x6c] sm:$0xf]
    %v58 = vld [vmem:[%s0 + $0x70] sm:$0xf]
    %v59 = vld [vmem:[%s0 + $0x74] sm:$0xf]
    %v60 = vld [vmem:[%s0 + $0x78] sm:$0xf]
    %v61 = vld [vmem:[%s0 + $0x7c] sm:$0xf]
    %v62 = vld [vmem:[%s0 + $0x80] sm:$0xf]
    %v63 = vld [vmem:[%s0 + $0x84] sm:$0xf]
    %v64 = vld [vmem:[%s0 + $0x88] sm:$0xf]
    %v65 = vld [vmem:[%s0 + $0x8c] sm:$0xf]
    %v66 = vld [vmem:[%s0 + $0x90] sm:$0xf]
    %v67 = vld [vmem:[%s0 + $0x94] sm:$0xf]
    %v68 = vld [vmem:[%s0 + $0x98] sm:$0xf]
    %v69 = vld [vmem:[%s0 + $0x9c] sm:$0xf]
    %v70 = vld [vmem:[%s0 + $0xa0] sm:$0xf]
    %v71 = vld [vmem:[%s0 + $0xa4] sm:$0xf]
    %v72 = vld [vmem:[%s0 + $0xa8] sm:$0xf]
    %v73 = vld [vmem:[%s0 + $0xac] sm:$0xf]
    %v74 = vld [vmem:[%s0 + $0xb0] sm:$0xf]
    %v75 = vld [vmem:[%s0 + $0xb4] sm:$0xf]
    %v76 = vld [vmem:[%s0 + $0xb8] sm:$0xf]
    %v77 = vld [vmem:[%s0 + $0xbc] sm:$0xf]
    %v78 = vld [vmem:[%s0 + $0xc0] sm:$0xf]
    %v79 = vld [vmem:[%s0 + $0xc4] sm:$0xf]
    %v80 = vld [vmem:[%s0 + $0xc8] sm:$0xf]
    %v81 = vld [vmem:[%s0 + $0xcc] sm:$0xf]
    %v82 = vld [vmem:[%s0 + $0xd0] sm:$0xf]
    %v83 = vld [vmem:[%s0 + $0xd4] sm:$0xf]
    %v84 = vld [vmem:[%s0 + $0xd8] sm:$0xf]
    %v85 = vld [vmem:[%s0 + $0xdc] sm:$0xf]
    %v86 = vld [vmem:[%s0 + $0xe0] sm:$0xf]
    %v87 = vld [vmem:[%s0 + $0xe4] sm:$0xf]
    %v88 = vld [vmem:[%s0 + $0xe8] sm:$0xf]
    %v89 = vld [vmem:[%s0 + $0xec] sm:$0xf]
    %v90 = vld [vmem:[%s0 + $0xf0] sm:$0xf]
    %v91 = vld [vmem:[%s0 + $0xf4] sm:$0xf]
    %v92 = vld [vmem:[%s0 + $0xf8] sm:$0xf]
    %v93 = vld [vmem:[%s0 + $0xfc] sm:$0xf]
    %v94 = vld [vmem:[%s1] sm:$0xf]
    %v95 = vld [vmem:[%s1 + $0x4] sm:$0xf]
    %v96 = vld [vmem:[%s1 + $0x8] sm:$0xf]
    %v97 = vld [vmem:[%s1 + $0xc] sm:$0xf]
    %v98 = vld [vmem:[%s1 + $0x10] sm:$0xf]
    %v99 = vld [vmem:[%s1 + $0x14] sm:$0xf]
    %v100 = vld [vmem:[%s1 + $0x18] sm:$0xf]
    %v101 = vld [vmem:[%s1 + $0x1c] sm:$0xf]
    %v102 = vld [vmem:[%s1 + $0x20] sm:$0xf]
    %v103 = vld [vmem:[%s1 + $0x24] sm:$0xf]
    %v104 = vld [vmem:[%s1 + $0x28] sm:$0xf]
    %v105 = vld [vmem:[%s1 + $0x2c] sm:$0xf]
    %v106 = vld [vmem:[%s1 + $0x30] sm:$0xf]
    %v107 = vld [vmem:[%s1 + $0x34] sm:$0xf]
    %v108 = vld [vmem:[%s1 + $0x38] sm:$0xf]
    %v109 = vld [vmem:[%s1 + $0x3c] sm:$0xf]
    %v110 = vld [vmem:[%s2] sm:$0x1]
    %v112 = vlaneseq
    %v113 = vshrl.u32 %v112, 7
    %v114 = vsub.s32 0, %v113
    %v115 = vrot.slane %v110, %v114
    %v181 = vunpack.c.l.b16 %v30
    %v182 = vunpack.c.l.b16 %v31
    %v183 = vunpack.c.l.b16 %v32
    %v184 = vunpack.c.l.b16 %v33
    %v185 = vunpack.c.l.b16 %v34
    %v186 = vunpack.c.l.b16 %v35
    %v187 = vunpack.c.l.b16 %v36
    %v188 = vunpack.c.l.b16 %v37
    %v189 = vunpack.c.l.b16 %v38
    %v190 = vunpack.c.l.b16 %v39
    %v191 = vunpack.c.l.b16 %v40
    %v192 = vunpack.c.l.b16 %v41
    %v193 = vunpack.c.l.b16 %v42
    %v194 = vunpack.c.l.b16 %v43
    %v195 = vunpack.c.l.b16 %v44
    %v196 = vunpack.c.l.b16 %v45
    %v197 = vunpack.c.l.b16 %v46
    %v198 = vunpack.c.l.b16 %v47
    %v199 = vunpack.c.l.b16 %v48
    %v200 = vunpack.c.l.b16 %v49
    %v201 = vunpack.c.l.b16 %v50
    %v202 = vunpack.c.l.b16 %v51
    %v203 = vunpack.c.l.b16 %v52
    %v204 = vunpack.c.l.b16 %v53
    %v205 = vunpack.c.l.b16 %v54
    %v206 = vunpack.c.l.b16 %v55
    %v207 = vunpack.c.l.b16 %v56
    %v208 = vunpack.c.l.b16 %v57
    %v209 = vunpack.c.l.b16 %v58
    %v210 = vunpack.c.l.b16 %v59
    %v211 = vunpack.c.l.b16 %v60
    %v212 = vunpack.c.l.b16 %v61
    %v213 = vunpack.c.l.b16 %v62
    %v214 = vunpack.c.l.b16 %v63
    %v215 = vunpack.c.l.b16 %v64
    %v216 = vunpack.c.l.b16 %v65
    %v217 = vunpack.c.l.b16 %v66
    %v218 = vunpack.c.l.b16 %v67
    %v219 = vunpack.c.l.b16 %v68
    %v220 = vunpack.c.l.b16 %v69
    %v221 = vunpack.c.l.b16 %v70
    %v222 = vunpack.c.l.b16 %v71
    %v223 = vunpack.c.l.b16 %v72
    %v224 = vunpack.c.l.b16 %v73
    %v225 = vunpack.c.l.b16 %v74
    %v226 = vunpack.c.l.b16 %v75
    %v227 = vunpack.c.l.b16 %v76
    %v228 = vunpack.c.l.b16 %v77
    %v229 = vunpack.c.l.b16 %v78
    %v230 = vunpack.c.l.b16 %v79
    %v231 = vunpack.c.l.b16 %v80
    %v232 = vunpack.c.l.b16 %v81
    %v233 = vunpack.c.l.b16 %v82
    %v234 = vunpack.c.l.b16 %v83
    %v235 = vunpack.c.l.b16 %v84
    %v236 = vunpack.c.l.b16 %v85
    %v237 = vunpack.c.l.b16 %v86
    %v238 = vunpack.c.l.b16 %v87
    %v239 = vunpack.c.l.b16 %v88
    %v240 = vunpack.c.l.b16 %v89
    %v241 = vunpack.c.l.b16 %v90
    %v242 = vunpack.c.l.b16 %v91
    %v243 = vunpack.c.l.b16 %v92
    %v244 = vunpack.c.l.b16 %v93
    %v245 = vpack.c.b16 %v182, %v181
    %v246 = vpack.c.b16 %v184, %v183
    %v247 = vpack.c.b16 %v186, %v185
    %v248 = vpack.c.b16 %v188, %v187
    %v249 = vpack.c.b16 %v190, %v189
    %v250 = vpack.c.b16 %v192, %v191
    %v251 = vpack.c.b16 %v194, %v193
    %v252 = vpack.c.b16 %v196, %v195
    %v253 = vpack.c.b16 %v198, %v197
    %v254 = vpack.c.b16 %v200, %v199
    %v255 = vpack.c.b16 %v202, %v201
    %v256 = vpack.c.b16 %v204, %v203
    %v257 = vpack.c.b16 %v206, %v205
    %v258 = vpack.c.b16 %v208, %v207
    %v259 = vpack.c.b16 %v210, %v209
    %v260 = vpack.c.b16 %v212, %v211
    %v261 = vpack.c.b16 %v214, %v213
    %v262 = vpack.c.b16 %v216, %v215
    %v263 = vpack.c.b16 %v218, %v217
    %v264 = vpack.c.b16 %v220, %v219
    %v265 = vpack.c.b16 %v222, %v221
    %v266 = vpack.c.b16 %v224, %v223
    %v267 = vpack.c.b16 %v226, %v225
    %v268 = vpack.c.b16 %v228, %v227
    %v269 = vpack.c.b16 %v230, %v229
    %v270 = vpack.c.b16 %v232, %v231
    %v271 = vpack.c.b16 %v234, %v233
    %v272 = vpack.c.b16 %v236, %v235
    %v273 = vpack.c.b16 %v238, %v237
    %v274 = vpack.c.b16 %v240, %v239
    %v275 = vpack.c.b16 %v242, %v241
    %v276 = vpack.c.b16 %v244, %v243
    %v325 = vunpack.c.l.b16 %v94
    %v326 = vunpack.c.l.b16 %v95
    %v327 = vunpack.c.l.b16 %v96
    %v328 = vunpack.c.l.b16 %v97
    %v329 = vunpack.c.l.b16 %v98
    %v330 = vunpack.c.l.b16 %v99
    %v331 = vunpack.c.l.b16 %v100
    %v332 = vunpack.c.l.b16 %v101
    %v333 = vunpack.c.l.b16 %v102
    %v334 = vunpack.c.l.b16 %v103
    %v335 = vunpack.c.l.b16 %v104
    %v336 = vunpack.c.l.b16 %v105
    %v337 = vunpack.c.l.b16 %v106
    %v338 = vunpack.c.l.b16 %v107
    %v339 = vunpack.c.l.b16 %v108
    %v340 = vunpack.c.l.b16 %v109
    %v341 = vpack.c.b16 %v326, %v325
    %v342 = vpack.c.b16 %v328, %v327
    %v343 = vpack.c.b16 %v330, %v329
    %v344 = vpack.c.b16 %v332, %v331
    %v345 = vpack.c.b16 %v334, %v333
    %v346 = vpack.c.b16 %v336, %v335
    %v347 = vpack.c.b16 %v338, %v337
    %v348 = vpack.c.b16 %v340, %v339
    %357 = vmatprep.subr.bf16.mxu0 0
    %358 = vmatpush1.bf16.msra.mxu0 %v348
    %359 = vmatprep.subr.bf16.mxu0 0
    %360 = vmatpush1.bf16.msra.mxu0 %v347
    %361 = vmatprep.subr.bf16.mxu0 0
    %362 = vmatpush1.bf16.msra.mxu0 %v346
    %363 = vmatprep.subr.bf16.mxu0 0
    %364 = vmatpush1.bf16.msra.mxu0 %v345
    %365 = vmatprep.subr.bf16.mxu0 0
    %366 = vmatpush1.bf16.msra.mxu0 %v344
    %367 = vmatprep.subr.bf16.mxu0 0
    %368 = vmatpush1.bf16.msra.mxu0 %v343
    %369 = vmatprep.subr.bf16.mxu0 0
    %370 = vmatpush1.bf16.msra.mxu0 %v342
    %371 = vmatprep.subr.bf16.mxu0 0
    %372 = vmatpush1.bf16.msra.mxu0 %v341
    %373 = vmatprep.subr.bf16.mxu0 0
    %374 = vmatpush2.bf16.msra.mxu0 0
    %375 = vmatprep.subr.bf16.mxu0 0
    %376 = vmatpush2.bf16.msra.mxu0 0
    %377 = vmatprep.subr.bf16.mxu0 0
    %378 = vmatpush2.bf16.msra.mxu0 0
    %379 = vmatprep.subr.bf16.mxu0 0
    %380 = vmatpush2.bf16.msra.mxu0 0
    %381 = vmatprep.subr.bf16.mxu0 0
    %382 = vmatpush2.bf16.msra.mxu0 0
    %383 = vmatprep.subr.bf16.mxu0 0
    %384 = vmatpush2.bf16.msra.mxu0 0
    %385 = vmatprep.subr.bf16.mxu0 0
    %386 = vmatpush2.bf16.msra.mxu0 0
    %387 = vmatprep.subr.bf16.mxu0 0
    %388 = vmatpush2.bf16.msra.mxu0 0
    %389 = vmatprep.mubr.bf16.mxu0 0
    %390 = vmatmul.mubr.bf16.gmra.mxu0 %v245
    %v391 = vpop.f32.mrf.mxu0
    %v392 = vadd.f32 %v115, %v391
    %v393 = vpop.f32.mrf.mxu0
    %v394 = vpop.f32.mrf.mxu0
    %v395 = vadd.f32 %v115, %v394
    %v396 = vpop.f32.mrf.mxu0
    %397 = vmatprep.mubr.bf16.mxu0 0
    %398 = vmatmul.mubr.bf16.gmra.mxu0 %v246
    %v399 = vpop.f32.mrf.mxu0
    %v400 = vadd.f32 %v115, %v399
    %v401 = vpop.f32.mrf.mxu0
    %v402 = vpop.f32.mrf.mxu0
    %v403 = vadd.f32 %v115, %v402
    %v404 = vpop.f32.mrf.mxu0
    %405 = vmatprep.mubr.bf16.mxu0 0
    %406 = vmatmul.mubr.bf16.gmra.mxu0 %v247
    %v407 = vpop.f32.mrf.mxu0
    %v408 = vadd.f32 %v115, %v407
    %v409 = vpop.f32.mrf.mxu0
    %v410 = vpop.f32.mrf.mxu0
    %v411 = vadd.f32 %v115, %v410
    %v412 = vpop.f32.mrf.mxu0
    %413 = vmatprep.mubr.bf16.mxu0 0
    %414 = vmatmul.mubr.bf16.gmra.mxu0 %v248
    %v415 = vpop.f32.mrf.mxu0
    %v416 = vadd.f32 %v115, %v415
    %v417 = vpop.f32.mrf.mxu0
    %v418 = vpop.f32.mrf.mxu0
    %v419 = vadd.f32 %v115, %v418
    %v420 = vpop.f32.mrf.mxu0
    %421 = vmatprep.mubr.bf16.mxu0 0
    %422 = vmatmul.mubr.bf16.gmra.mxu0 %v249
    %v423 = vpop.f32.mrf.mxu0
    %v424 = vadd.f32 %v115, %v423
    %v425 = vpop.f32.mrf.mxu0
    %v426 = vpop.f32.mrf.mxu0
    %v427 = vadd.f32 %v115, %v426
    %v428 = vpop.f32.mrf.mxu0
    %429 = vmatprep.mubr.bf16.mxu0 0
    %430 = vmatmul.mubr.bf16.gmra.mxu0 %v250
    %v431 = vpop.f32.mrf.mxu0
    %v432 = vadd.f32 %v115, %v431
    %v433 = vpop.f32.mrf.mxu0
    %v434 = vpop.f32.mrf.mxu0
    %v435 = vadd.f32 %v115, %v434
    %v436 = vpop.f32.mrf.mxu0
    %437 = vmatprep.mubr.bf16.mxu0 0
    %438 = vmatmul.mubr.bf16.gmra.mxu0 %v251
    %v439 = vpop.f32.mrf.mxu0
    %v440 = vadd.f32 %v115, %v439
    %v441 = vpop.f32.mrf.mxu0
    %v442 = vpop.f32.mrf.mxu0
    %v443 = vadd.f32 %v115, %v442
    %v444 = vpop.f32.mrf.mxu0
    %445 = vmatprep.mubr.bf16.mxu0 0
    %446 = vmatmul.mubr.bf16.gmra.mxu0 %v252
    %v447 = vpop.f32.mrf.mxu0
    %v448 = vadd.f32 %v115, %v447
    %v449 = vpop.f32.mrf.mxu0
    %v450 = vpop.f32.mrf.mxu0
    %v451 = vadd.f32 %v115, %v450
    %v452 = vpop.f32.mrf.mxu0
    %453 = vmatprep.mubr.bf16.mxu0 0
    %454 = vmatmul.mubr.bf16.gmra.mxu0 %v253
    %v455 = vpop.f32.mrf.mxu0
    %v456 = vadd.f32 %v115, %v455
    %v457 = vpop.f32.mrf.mxu0
    %v458 = vpop.f32.mrf.mxu0
    %v459 = vadd.f32 %v115, %v458
    %v460 = vpop.f32.mrf.mxu0
    %461 = vmatprep.mubr.bf16.mxu0 0
    %462 = vmatmul.mubr.bf16.gmra.mxu0 %v254
    %v463 = vpop.f32.mrf.mxu0
    %v464 = vadd.f32 %v115, %v463
    %v465 = vpop.f32.mrf.mxu0
    %v466 = vpop.f32.mrf.mxu0
    %v467 = vadd.f32 %v115, %v466
    %v468 = vpop.f32.mrf.mxu0
    %469 = vmatprep.mubr.bf16.mxu0 0
    %470 = vmatmul.mubr.bf16.gmra.mxu0 %v255
    %v471 = vpop.f32.mrf.mxu0
    %v472 = vadd.f32 %v115, %v471
    %v473 = vpop.f32.mrf.mxu0
    %v474 = vpop.f32.mrf.mxu0
    %v475 = vadd.f32 %v115, %v474
    %v476 = vpop.f32.mrf.mxu0
    %477 = vmatprep.mubr.bf16.mxu0 0
    %478 = vmatmul.mubr.bf16.gmra.mxu0 %v256
    %v479 = vpop.f32.mrf.mxu0
    %v480 = vadd.f32 %v115, %v479
    %v481 = vpop.f32.mrf.mxu0
    %v482 = vpop.f32.mrf.mxu0
    %v483 = vadd.f32 %v115, %v482
    %v484 = vpop.f32.mrf.mxu0
    %485 = vmatprep.mubr.bf16.mxu0 0
    %486 = vmatmul.mubr.bf16.gmra.mxu0 %v257
    %v487 = vpop.f32.mrf.mxu0
    %v488 = vadd.f32 %v115, %v487
    %v489 = vpop.f32.mrf.mxu0
    %v490 = vpop.f32.mrf.mxu0
    %v491 = vadd.f32 %v115, %v490
    %v492 = vpop.f32.mrf.mxu0
    %493 = vmatprep.mubr.bf16.mxu0 0
    %494 = vmatmul.mubr.bf16.gmra.mxu0 %v258
    %v495 = vpop.f32.mrf.mxu0
    %v496 = vadd.f32 %v115, %v495
    %v497 = vpop.f32.mrf.mxu0
    %v498 = vpop.f32.mrf.mxu0
    %v499 = vadd.f32 %v115, %v498
    %v500 = vpop.f32.mrf.mxu0
    %501 = vmatprep.mubr.bf16.mxu0 0
    %502 = vmatmul.mubr.bf16.gmra.mxu0 %v259
    %v503 = vpop.f32.mrf.mxu0
    %v504 = vadd.f32 %v115, %v503
    %v505 = vpop.f32.mrf.mxu0
    %v506 = vpop.f32.mrf.mxu0
    %v507 = vadd.f32 %v115, %v506
    %v508 = vpop.f32.mrf.mxu0
    %509 = vmatprep.mubr.bf16.mxu0 0
    %510 = vmatmul.mubr.bf16.gmra.mxu0 %v260
    %v511 = vpop.f32.mrf.mxu0
    %v512 = vadd.f32 %v115, %v511
    %v513 = vpop.f32.mrf.mxu0
    %v514 = vpop.f32.mrf.mxu0
    %v515 = vadd.f32 %v115, %v514
    %v516 = vpop.f32.mrf.mxu0
    %517 = vmatprep.mubr.bf16.mxu0 0
    %518 = vmatmul.mubr.bf16.gmra.mxu0 %v261
    %v519 = vpop.f32.mrf.mxu0
    %v520 = vadd.f32 %v115, %v519
    %v521 = vpop.f32.mrf.mxu0
    %v522 = vpop.f32.mrf.mxu0
    %v523 = vadd.f32 %v115, %v522
    %v524 = vpop.f32.mrf.mxu0
    %525 = vmatprep.mubr.bf16.mxu0 0
    %526 = vmatmul.mubr.bf16.gmra.mxu0 %v262
    %v527 = vpop.f32.mrf.mxu0
    %v528 = vadd.f32 %v115, %v527
    %v529 = vpop.f32.mrf.mxu0
    %v530 = vpop.f32.mrf.mxu0
    %v531 = vadd.f32 %v115, %v530
    %v532 = vpop.f32.mrf.mxu0
    %533 = vmatprep.mubr.bf16.mxu0 0
    %534 = vmatmul.mubr.bf16.gmra.mxu0 %v263
    %v535 = vpop.f32.mrf.mxu0
    %v536 = vadd.f32 %v115, %v535
    %v537 = vpop.f32.mrf.mxu0
    %v538 = vpop.f32.mrf.mxu0
    %v539 = vadd.f32 %v115, %v538
    %v540 = vpop.f32.mrf.mxu0
    %541 = vmatprep.mubr.bf16.mxu0 0
    %542 = vmatmul.mubr.bf16.gmra.mxu0 %v264
    %v543 = vpop.f32.mrf.mxu0
    %v544 = vadd.f32 %v115, %v543
    %v545 = vpop.f32.mrf.mxu0
    %v546 = vpop.f32.mrf.mxu0
    %v547 = vadd.f32 %v115, %v546
    %v548 = vpop.f32.mrf.mxu0
    %549 = vmatprep.mubr.bf16.mxu0 0
    %550 = vmatmul.mubr.bf16.gmra.mxu0 %v265
    %v551 = vpop.f32.mrf.mxu0
    %v552 = vadd.f32 %v115, %v551
    %v553 = vpop.f32.mrf.mxu0
    %v554 = vpop.f32.mrf.mxu0
    %v555 = vadd.f32 %v115, %v554
    %v556 = vpop.f32.mrf.mxu0
    %557 = vmatprep.mubr.bf16.mxu0 0
    %558 = vmatmul.mubr.bf16.gmra.mxu0 %v266
    %v559 = vpop.f32.mrf.mxu0
    %v560 = vadd.f32 %v115, %v559
    %v561 = vpop.f32.mrf.mxu0
    %v562 = vpop.f32.mrf.mxu0
    %v563 = vadd.f32 %v115, %v562
    %v564 = vpop.f32.mrf.mxu0
    %565 = vmatprep.mubr.bf16.mxu0 0
    %566 = vmatmul.mubr.bf16.gmra.mxu0 %v267
    %v567 = vpop.f32.mrf.mxu0
    %v568 = vadd.f32 %v115, %v567
    %v569 = vpop.f32.mrf.mxu0
    %v570 = vpop.f32.mrf.mxu0
    %v571 = vadd.f32 %v115, %v570
    %v572 = vpop.f32.mrf.mxu0
    %573 = vmatprep.mubr.bf16.mxu0 0
    %574 = vmatmul.mubr.bf16.gmra.mxu0 %v268
    %v575 = vpop.f32.mrf.mxu0
    %v576 = vadd.f32 %v115, %v575
    %v577 = vpop.f32.mrf.mxu0
    %v578 = vpop.f32.mrf.mxu0
    %v579 = vadd.f32 %v115, %v578
    %v580 = vpop.f32.mrf.mxu0
    %581 = vmatprep.mubr.bf16.mxu0 0
    %582 = vmatmul.mubr.bf16.gmra.mxu0 %v269
    %v583 = vpop.f32.mrf.mxu0
    %v584 = vadd.f32 %v115, %v583
    %v585 = vpop.f32.mrf.mxu0
    %v586 = vpop.f32.mrf.mxu0
    %v587 = vadd.f32 %v115, %v586
    %v588 = vpop.f32.mrf.mxu0
    %589 = vmatprep.mubr.bf16.mxu0 0
    %590 = vmatmul.mubr.bf16.gmra.mxu0 %v270
    %v591 = vpop.f32.mrf.mxu0
    %v592 = vadd.f32 %v115, %v591
    %v593 = vpop.f32.mrf.mxu0
    %v594 = vpop.f32.mrf.mxu0
    %v595 = vadd.f32 %v115, %v594
    %v596 = vpop.f32.mrf.mxu0
    %597 = vmatprep.mubr.bf16.mxu0 0
    %598 = vmatmul.mubr.bf16.gmra.mxu0 %v271
    %v599 = vpop.f32.mrf.mxu0
    %v600 = vadd.f32 %v115, %v599
    %v601 = vpop.f32.mrf.mxu0
    %v602 = vpop.f32.mrf.mxu0
    %v603 = vadd.f32 %v115, %v602
    %v604 = vpop.f32.mrf.mxu0
    %605 = vmatprep.mubr.bf16.mxu0 0
    %606 = vmatmul.mubr.bf16.gmra.mxu0 %v272
    %v607 = vpop.f32.mrf.mxu0
    %v608 = vadd.f32 %v115, %v607
    %v609 = vpop.f32.mrf.mxu0
    %v610 = vpop.f32.mrf.mxu0
    %v611 = vadd.f32 %v115, %v610
    %v612 = vpop.f32.mrf.mxu0
    %613 = vmatprep.mubr.bf16.mxu0 0
    %614 = vmatmul.mubr.bf16.gmra.mxu0 %v273
    %v615 = vpop.f32.mrf.mxu0
    %v616 = vadd.f32 %v115, %v615
    %v617 = vpop.f32.mrf.mxu0
    %v618 = vpop.f32.mrf.mxu0
    %v619 = vadd.f32 %v115, %v618
    %v620 = vpop.f32.mrf.mxu0
    %621 = vmatprep.mubr.bf16.mxu0 0
    %622 = vmatmul.mubr.bf16.gmra.mxu0 %v274
    %v623 = vpop.f32.mrf.mxu0
    %v624 = vadd.f32 %v115, %v623
    %v625 = vpop.f32.mrf.mxu0
    %v626 = vpop.f32.mrf.mxu0
    %v627 = vadd.f32 %v115, %v626
    %v628 = vpop.f32.mrf.mxu0
    %629 = vmatprep.mubr.bf16.mxu0 0
    %630 = vmatmul.mubr.bf16.gmra.mxu0 %v275
    %v631 = vpop.f32.mrf.mxu0
    %v632 = vadd.f32 %v115, %v631
    %v633 = vpop.f32.mrf.mxu0
    %v634 = vpop.f32.mrf.mxu0
    %v635 = vadd.f32 %v115, %v634
    %v636 = vpop.f32.mrf.mxu0
    %637 = vmatprep.mubr.bf16.mxu0 0
    %638 = vmatmul.mubr.bf16.gmra.mxu0 %v276
    %v639 = vpop.f32.mrf.mxu0
    %v640 = vadd.f32 %v115, %v639
    %v641 = vpop.f32.mrf.mxu0
    %v642 = vpop.f32.mrf.mxu0
    %v643 = vadd.f32 %v115, %v642
    %v644 = vpop.f32.mrf.mxu0
    %645 = vdwg.mxu0
    %v646 = vmax.f32 %v392, 0.0
    %v647 = vmax.f32 %v395, 0.0
    %v648 = vmax.f32 %v400, 0.0
    %v649 = vmax.f32 %v403, 0.0
    %v650 = vmax.f32 %v408, 0.0
    %v651 = vmax.f32 %v411, 0.0
    %v652 = vmax.f32 %v416, 0.0
    %v653 = vmax.f32 %v419, 0.0
    %v654 = vmax.f32 %v424, 0.0
    %v655 = vmax.f32 %v427, 0.0
    %v656 = vmax.f32 %v432, 0.0
    %v657 = vmax.f32 %v435, 0.0
    %v658 = vmax.f32 %v440, 0.0
    %v659 = vmax.f32 %v443, 0.0
    %v660 = vmax.f32 %v448, 0.0
    %v661 = vmax.f32 %v451, 0.0
    %v662 = vmax.f32 %v456, 0.0
    %v663 = vmax.f32 %v459, 0.0
    %v664 = vmax.f32 %v464, 0.0
    %v665 = vmax.f32 %v467, 0.0
    %v666 = vmax.f32 %v472, 0.0
    %v667 = vmax.f32 %v475, 0.0
    %v668 = vmax.f32 %v480, 0.0
    %v669 = vmax.f32 %v483, 0.0
    %v670 = vmax.f32 %v488, 0.0
    %v671 = vmax.f32 %v491, 0.0
    %v672 = vmax.f32 %v496, 0.0
    %v673 = vmax.f32 %v499, 0.0
    %v674 = vmax.f32 %v504, 0.0
    %v675 = vmax.f32 %v507, 0.0
    %v676 = vmax.f32 %v512, 0.0
    %v677 = vmax.f32 %v515, 0.0
    %v678 = vmax.f32 %v520, 0.0
    %v679 = vmax.f32 %v523, 0.0
    %v680 = vmax.f32 %v528, 0.0
    %v681 = vmax.f32 %v531, 0.0
    %v682 = vmax.f32 %v536, 0.0
    %v683 = vmax.f32 %v539, 0.0
    %v684 = vmax.f32 %v544, 0.0
    %v685 = vmax.f32 %v547, 0.0
    %v686 = vmax.f32 %v552, 0.0
    %v687 = vmax.f32 %v555, 0.0
    %v688 = vmax.f32 %v560, 0.0
    %v689 = vmax.f32 %v563, 0.0
    %v690 = vmax.f32 %v568, 0.0
    %v691 = vmax.f32 %v571, 0.0
    %v692 = vmax.f32 %v576, 0.0
    %v693 = vmax.f32 %v579, 0.0
    %v694 = vmax.f32 %v584, 0.0
    %v695 = vmax.f32 %v587, 0.0
    %v696 = vmax.f32 %v592, 0.0
    %v697 = vmax.f32 %v595, 0.0
    %v698 = vmax.f32 %v600, 0.0
    %v699 = vmax.f32 %v603, 0.0
    %v700 = vmax.f32 %v608, 0.0
    %v701 = vmax.f32 %v611, 0.0
    %v702 = vmax.f32 %v616, 0.0
    %v703 = vmax.f32 %v619, 0.0
    %v704 = vmax.f32 %v624, 0.0
    %v705 = vmax.f32 %v627, 0.0
    %v706 = vmax.f32 %v632, 0.0
    %v707 = vmax.f32 %v635, 0.0
    %v708 = vmax.f32 %v640, 0.0
    %v709 = vmax.f32 %v643, 0.0
    %v710 = vadd.f32 %v646, %v647
    %v711 = vadd.f32 %v710, %v648
    %v712 = vadd.f32 %v711, %v649
    %v713 = vadd.f32 %v712, %v650
    %v714 = vadd.f32 %v713, %v651
    %v715 = vadd.f32 %v714, %v652
    %v716 = vadd.f32 %v715, %v653
    %v717 = vadd.f32 %v716, %v654
    %v718 = vadd.f32 %v717, %v655
    %v719 = vadd.f32 %v718, %v656
    %v720 = vadd.f32 %v719, %v657
    %v721 = vadd.f32 %v720, %v658
    %v722 = vadd.f32 %v721, %v659
    %v723 = vadd.f32 %v722, %v660
    %v724 = vadd.f32 %v723, %v661
    %v725 = vadd.f32 %v724, %v662
    %v726 = vadd.f32 %v725, %v663
    %v727 = vadd.f32 %v726, %v664
    %v728 = vadd.f32 %v727, %v665
    %v729 = vadd.f32 %v728, %v666
    %v730 = vadd.f32 %v729, %v667
    %v731 = vadd.f32 %v730, %v668
    %v732 = vadd.f32 %v731, %v669
    %v733 = vadd.f32 %v732, %v670
    %v734 = vadd.f32 %v733, %v671
    %v735 = vadd.f32 %v734, %v672
    %v736 = vadd.f32 %v735, %v673
    %v737 = vadd.f32 %v736, %v674
    %v738 = vadd.f32 %v737, %v675
    %v739 = vadd.f32 %v738, %v676
    %v740 = vadd.f32 %v739, %v677
    %v741 = vrot.slane %v740, 4
    %v742 = vadd.f32 %v740, %v741
    %v743 = vrot.slane %v742, 2
    %v744 = vadd.f32 %v742, %v743
    %v745 = vrot.slane %v744, 1
    %v746 = vadd.f32 %v744, %v745
    %v747 = vadd.f32 %v678, %v679
    %v748 = vadd.f32 %v747, %v680
    %v749 = vadd.f32 %v748, %v681
    %v750 = vadd.f32 %v749, %v682
    %v751 = vadd.f32 %v750, %v683
    %v752 = vadd.f32 %v751, %v684
    %v753 = vadd.f32 %v752, %v685
    %v754 = vadd.f32 %v753, %v686
    %v755 = vadd.f32 %v754, %v687
    %v756 = vadd.f32 %v755, %v688
    %v757 = vadd.f32 %v756, %v689
    %v758 = vadd.f32 %v757, %v690
    %v759 = vadd.f32 %v758, %v691
    %v760 = vadd.f32 %v759, %v692
    %v761 = vadd.f32 %v760, %v693
    %v762 = vadd.f32 %v761, %v694
    %v763 = vadd.f32 %v762, %v695
    %v764 = vadd.f32 %v763, %v696
    %v765 = vadd.f32 %v764, %v697
    %v766 = vadd.f32 %v765, %v698
    %v767 = vadd.f32 %v766, %v699
    %v768 = vadd.f32 %v767, %v700
    %v769 = vadd.f32 %v768, %v701
    %v770 = vadd.f32 %v769, %v702
    %v771 = vadd.f32 %v770, %v703
    %v772 = vadd.f32 %v771, %v704
    %v773 = vadd.f32 %v772, %v705
    %v774 = vadd.f32 %v773, %v706
    %v775 = vadd.f32 %v774, %v707
    %v776 = vadd.f32 %v775, %v708
    %v777 = vadd.f32 %v776, %v709
    %v778 = vrot.slane %v777, 4
    %v779 = vadd.f32 %v777, %v778
    %v780 = vrot.slane %v779, 2
    %v781 = vadd.f32 %v779, %v780
    %v782 = vrot.slane %v781, 1
    %v783 = vadd.f32 %v781, %v782
    %v784 = vmul.f32 %v746, 0.00390625
    %v785 = vmul.f32 %v783, 0.00390625
    %v786 = vpack.c.bf16 %v784, %v784
    %v787 = vpack.c.bf16 %v785, %v785
    %v788 = vld [vmem:[%s3] sm:$0xf]
    %v789 = vld [vmem:[%s3 + $0x4] sm:$0xf]
    %v790 = vld [vmem:[%s3 + $0x8] sm:$0xf]
    %v791 = vld [vmem:[%s3 + $0xc] sm:$0xf]
    %v792 = vld [vmem:[%s3 + $0x10] sm:$0xf]
    %v793 = vld [vmem:[%s3 + $0x14] sm:$0xf]
    %v794 = vld [vmem:[%s3 + $0x18] sm:$0xf]
    %v795 = vld [vmem:[%s3 + $0x1c] sm:$0xf]
    %v796 = vld [vmem:[%s3 + $0x20] sm:$0xf]
    %v797 = vld [vmem:[%s3 + $0x24] sm:$0xf]
    %v798 = vld [vmem:[%s3 + $0x28] sm:$0xf]
    %v799 = vld [vmem:[%s3 + $0x2c] sm:$0xf]
    %v800 = vld [vmem:[%s3 + $0x30] sm:$0xf]
    %v801 = vld [vmem:[%s3 + $0x34] sm:$0xf]
    %v802 = vld [vmem:[%s3 + $0x38] sm:$0xf]
    %v803 = vld [vmem:[%s3 + $0x3c] sm:$0xf]
    %v804 = vld [vmem:[%s4] sm:$0x1]
    %v806 = vlaneseq
    %v807 = vshrl.u32 %v806, 7
    %v808 = vsub.s32 0, %v807
    %v809 = vrot.slane %v804, %v808
    %v813 = vunpack.c.l.b16 %v786
    %v814 = vunpack.c.l.b16 %v787
    %vm815 = vcmask 1041409
    %v816 = vsel %vm815, %v814, %v813
    %v817 = vpack.c.b16 %v816, %v816
    %v835 = vunpack.c.l.b16 %v788
    %v836 = vunpack.c.l.b16 %v789
    %v837 = vunpack.c.l.b16 %v790
    %v838 = vunpack.c.l.b16 %v791
    %v839 = vunpack.c.l.b16 %v792
    %v840 = vunpack.c.l.b16 %v793
    %v841 = vunpack.c.l.b16 %v794
    %v842 = vunpack.c.l.b16 %v795
    %v843 = vunpack.c.l.b16 %v796
    %v844 = vunpack.c.l.b16 %v797
    %v845 = vunpack.c.l.b16 %v798
    %v846 = vunpack.c.l.b16 %v799
    %v847 = vunpack.c.l.b16 %v800
    %v848 = vunpack.c.l.b16 %v801
    %v849 = vunpack.c.l.b16 %v802
    %v850 = vunpack.c.l.b16 %v803
    %v851 = vpack.c.b16 %v836, %v835
    %v852 = vpack.c.b16 %v838, %v837
    %v853 = vpack.c.b16 %v840, %v839
    %v854 = vpack.c.b16 %v842, %v841
    %v855 = vpack.c.b16 %v844, %v843
    %v856 = vpack.c.b16 %v846, %v845
    %v857 = vpack.c.b16 %v848, %v847
    %v858 = vpack.c.b16 %v850, %v849
    %867 = vmatprep.subr.bf16.mxu0 0
    %868 = vmatpush1.bf16.msra.mxu0 %v858
    %869 = vmatprep.subr.bf16.mxu0 0
    %870 = vmatpush1.bf16.msra.mxu0 %v857
    %871 = vmatprep.subr.bf16.mxu0 0
    %872 = vmatpush1.bf16.msra.mxu0 %v856
    %873 = vmatprep.subr.bf16.mxu0 0
    %874 = vmatpush1.bf16.msra.mxu0 %v855
    %875 = vmatprep.subr.bf16.mxu0 0
    %876 = vmatpush1.bf16.msra.mxu0 %v854
    %877 = vmatprep.subr.bf16.mxu0 0
    %878 = vmatpush1.bf16.msra.mxu0 %v853
    %879 = vmatprep.subr.bf16.mxu0 0
    %880 = vmatpush1.bf16.msra.mxu0 %v852
    %881 = vmatprep.subr.bf16.mxu0 0
    %882 = vmatpush1.bf16.msra.mxu0 %v851
    %883 = vmatprep.subr.bf16.mxu0 0
    %884 = vmatpush2.bf16.msra.mxu0 0
    %885 = vmatprep.subr.bf16.mxu0 0
    %886 = vmatpush2.bf16.msra.mxu0 0
    %887 = vmatprep.subr.bf16.mxu0 0
    %888 = vmatpush2.bf16.msra.mxu0 0
    %889 = vmatprep.subr.bf16.mxu0 0
    %890 = vmatpush2.bf16.msra.mxu0 0
    %891 = vmatprep.subr.bf16.mxu0 0
    %892 = vmatpush2.bf16.msra.mxu0 0
    %893 = vmatprep.subr.bf16.mxu0 0
    %894 = vmatpush2.bf16.msra.mxu0 0
    %895 = vmatprep.subr.bf16.mxu0 0
    %896 = vmatpush2.bf16.msra.mxu0 0
    %897 = vmatprep.subr.bf16.mxu0 0
    %898 = vmatpush2.bf16.msra.mxu0 0
    %899 = vmatprep.mubr.bf16.mxu0 0
    %900 = vmatmul.mubr.bf16.gmra.mxu0 %v817
    %v901 = vpop.f32.mrf.mxu0
    %v902 = vadd.f32 %v809, %v901
    %v903 = vpop.f32.mrf.mxu0
    %v904 = vpop.f32.mrf.mxu0
    %v905 = vpop.f32.mrf.mxu0
    %906 = vdwg.mxu0
    %907 = vst [vmem:[#allocation2] sm:$0x3] %v902
    %v908 = vpack.c.bf16 %v902, %v902
    %v909 = vld [vmem:[%s5] sm:$0xf]
    %v910 = vld [vmem:[%s5 + $0x4] sm:$0xf]
    %v911 = vld [vmem:[%s5 + $0x8] sm:$0xf]
    %v912 = vld [vmem:[%s5 + $0xc] sm:$0xf]
    %v913 = vld [vmem:[%s5 + $0x10] sm:$0xf]
    %v914 = vld [vmem:[%s5 + $0x14] sm:$0xf]
    %v915 = vld [vmem:[%s5 + $0x18] sm:$0xf]
    %v916 = vld [vmem:[%s5 + $0x1c] sm:$0xf]
    %v917 = vld [vmem:[%s5 + $0x20] sm:$0xf]
    %v918 = vld [vmem:[%s5 + $0x24] sm:$0xf]
    %v919 = vld [vmem:[%s5 + $0x28] sm:$0xf]
    %v920 = vld [vmem:[%s5 + $0x2c] sm:$0xf]
    %v921 = vld [vmem:[%s5 + $0x30] sm:$0xf]
    %v922 = vld [vmem:[%s5 + $0x34] sm:$0xf]
    %v923 = vld [vmem:[%s5 + $0x38] sm:$0xf]
    %v924 = vld [vmem:[%s5 + $0x3c] sm:$0xf]
    %v925 = vld [vmem:[%s6] sm:$0x1]
    %v927 = vlaneseq
    %v928 = vshrl.u32 %v927, 7
    %v929 = vsub.s32 0, %v928
    %v930 = vrot.slane %v925, %v929
    %v948 = vunpack.c.l.b16 %v909
    %v949 = vunpack.c.l.b16 %v910
    %v950 = vunpack.c.l.b16 %v911
    %v951 = vunpack.c.l.b16 %v912
    %v952 = vunpack.c.l.b16 %v913
    %v953 = vunpack.c.l.b16 %v914
    %v954 = vunpack.c.l.b16 %v915
    %v955 = vunpack.c.l.b16 %v916
    %v956 = vunpack.c.l.b16 %v917
    %v957 = vunpack.c.l.b16 %v918
    %v958 = vunpack.c.l.b16 %v919
    %v959 = vunpack.c.l.b16 %v920
    %v960 = vunpack.c.l.b16 %v921
    %v961 = vunpack.c.l.b16 %v922
    %v962 = vunpack.c.l.b16 %v923
    %v963 = vunpack.c.l.b16 %v924
    %v964 = vpack.c.b16 %v949, %v948
    %v965 = vpack.c.b16 %v951, %v950
    %v966 = vpack.c.b16 %v953, %v952
    %v967 = vpack.c.b16 %v955, %v954
    %v968 = vpack.c.b16 %v957, %v956
    %v969 = vpack.c.b16 %v959, %v958
    %v970 = vpack.c.b16 %v961, %v960
    %v971 = vpack.c.b16 %v963, %v962
    %980 = vmatprep.subr.bf16.mxu0 0
    %981 = vmatpush1.bf16.msra.mxu0 %v971
    %982 = vmatprep.subr.bf16.mxu0 0
    %983 = vmatpush1.bf16.msra.mxu0 %v970
    %984 = vmatprep.subr.bf16.mxu0 0
    %985 = vmatpush1.bf16.msra.mxu0 %v969
    %986 = vmatprep.subr.bf16.mxu0 0
    %987 = vmatpush1.bf16.msra.mxu0 %v968
    %988 = vmatprep.subr.bf16.mxu0 0
    %989 = vmatpush1.bf16.msra.mxu0 %v967
    %990 = vmatprep.subr.bf16.mxu0 0
    %991 = vmatpush1.bf16.msra.mxu0 %v966
    %992 = vmatprep.subr.bf16.mxu0 0
    %993 = vmatpush1.bf16.msra.mxu0 %v965
    %994 = vmatprep.subr.bf16.mxu0 0
    %995 = vmatpush1.bf16.msra.mxu0 %v964
    %996 = vmatprep.subr.bf16.mxu0 0
    %997 = vmatpush2.bf16.msra.mxu0 0
    %998 = vmatprep.subr.bf16.mxu0 0
    %999 = vmatpush2.bf16.msra.mxu0 0
    %1000 = vmatprep.subr.bf16.mxu0 0
    %1001 = vmatpush2.bf16.msra.mxu0 0
    %1002 = vmatprep.subr.bf16.mxu0 0
    %1003 = vmatpush2.bf16.msra.mxu0 0
    %1004 = vmatprep.subr.bf16.mxu0 0
    %1005 = vmatpush2.bf16.msra.mxu0 0
    %1006 = vmatprep.subr.bf16.mxu0 0
    %1007 = vmatpush2.bf16.msra.mxu0 0
    %1008 = vmatprep.subr.bf16.mxu0 0
    %1009 = vmatpush2.bf16.msra.mxu0 0
    %1010 = vmatprep.subr.bf16.mxu0 0
    %1011 = vmatpush2.bf16.msra.mxu0 0
    %1012 = vmatprep.mubr.bf16.mxu0 0
    %1013 = vmatmul.mubr.bf16.gmra.mxu0 %v908
    %v1014 = vpop.f32.mrf.mxu0
    %v1015 = vadd.f32 %v930, %v1014
    %v1016 = vpop.f32.mrf.mxu0
    %v1017 = vpop.f32.mrf.mxu0
    %v1018 = vpop.f32.mrf.mxu0
    %1019 = vdwg.mxu0
    %1020 = vst [vmem:[%s8] sm:$0x3] %v1015
    // Predicated region
    $region30: #{net_wrapper_forward.2} parent=1 // pred_check
      _
    $region31: #{net_wrapper_forward.2} parent=1 // pred_check_branch
      %1022 = sbr.rel (0) target = $region33
    $region32: #{net_wrapper_forward.2} parent=1 // pred_region
      %s1024 = ssub.s32 32, 32
      %1025 = vsyncadd [#allocation3], %s1024
      %s1027 = sshll.u32 [#allocation2], 4
      %s1028 = int_to_ptr.vmem [resolvable:$true] %s1027
      %1030 = dma.vmem_to_hbm [thread:$0]  %s1028, 32, %s7, [#allocation3]
    $region33: #{net_wrapper_forward.2} parent=1 // pred_fallthru
      _
    // Predicated region
    $region34: #{net_wrapper_forward.2} parent=1 // pred_check
      _
    $region35: #{net_wrapper_forward.2} parent=1 // pred_check_branch
      %1032 = sbr.rel (0) target = $region37
    $region36: #{net_wrapper_forward.2} parent=1 // pred_region
      _
    $region37: #{net_wrapper_forward.2} parent=1 // pred_fallthru
      _
    // Predicated region
    $region38: #{net_wrapper_forward.2} parent=1 // pred_check
      _
    $region39: #{net_wrapper_forward.2} parent=1 // pred_check_branch
      %1034 = sbr.rel (0) target = $region41
    $region40: #{net_wrapper_forward.2} parent=1 // pred_region
      %1035 = dma.done [#allocation3], 32
    $region41: #{net_wrapper_forward.2} parent=1 // pred_fallthru
      _
    // Predicated region
    $region42: #{net_wrapper_forward.2} parent=1 // pred_check
      _
    $region43: #{net_wrapper_forward.2} parent=1 // pred_check_branch
      %1037 = sbr.rel (0) target = $region45
    $region44: #{net_wrapper_forward.2} parent=1 // pred_region
      _
    $region45: #{net_wrapper_forward.2} parent=1 // pred_fallthru
      _
    %1038 = vsyncpa [#allocation3], 1

</llo_original>
